<compile_context>
chip_gen: v6e
topology: v6e:2x2x1
jax: 0.10.0
libtpu: 0.0.40
codegen_flags: <defaults>
</compile_context>

<pallas_src>
import functools

import jax
import jax.numpy as jnp
from jax.experimental import pallas as pl
from jax.experimental.pallas import tpu as pltpu

_MIB = 1024 * 1024
_LANE = 128
_SUBLANE = 8


def _round_up(x: int, m: int) -> int:
    return ((x + m - 1) // m) * m


def _vmem_capacity_bytes() -> int:
    """Best-effort physical-VMEM query; conservative fallback (v7x per-TC = 64 MiB)."""
    try:
        info = pltpu.get_tpu_info()
        for name in ("vmem_capacity_bytes", "vmem_size_bytes", "vmem_bytes"):
            v = getattr(info, name, None)
            if v:
                return int(v)
    except Exception:
        pass
    return 64 * _MIB


def _choose_tiles(Bp, Kp, Np, w_itemsize, x_itemsize):
    """Pick (tm, tk, tn, vmem_limit_bytes) so double-buffered streams fit in VMEM."""
    vmem = _vmem_capacity_bytes()
    if vmem >= 96 * _MIB:          # v5e / v6e: 128 MiB physical -> fat tiles
        tgt_tk, tgt_tn = 1024, 2048
        vmem_limit = min(int(vmem * 0.6), 96 * _MIB)
    else:                          # v7x: 64 MiB per TensorCore -> keep headroom
        tgt_tk, tgt_tn = 1024, 1024
        vmem_limit = min(int(vmem * 0.5), 28 * _MIB)

    tm = min(512, Bp)              # batch is small for ClipCap; still tiled for safety
    tk = min(tgt_tk, Kp)
    tn = min(tgt_tn, Np)

    def tile_bytes(tm_, tk_, tn_):
        w_bufs = 2 * tk_ * tn_ * w_itemsize      # double-buffered weight stream
        x_bufs = 2 * tm_ * tk_ * x_itemsize      # double-buffered activation tile
        b_bufs = 2 * tn_ * 4                     # bias tile
        o_bufs = 2 * tm_ * tn_ * 4               # output tile (fp32)
        acc = tm_ * tn_ * 4                      # fp32 accumulator scratch
        return w_bufs + x_bufs + b_bufs + o_bufs + acc

    budget = int(vmem_limit * 0.85)
    while tile_bytes(tm, tk, tn) > budget and tk > _LANE:
        tk = max(_LANE, _round_up(tk // 2, _LANE))
    while tile_bytes(tm, tk, tn) > budget and tn > _LANE:
        tn = max(_LANE, _round_up(tn // 2, _LANE))
    while tile_bytes(tm, tk, tn) > budget and tm > _SUBLANE:
        tm = max(_SUBLANE, _round_up(tm // 2, _SUBLANE))
    return tm, tk, tn, vmem_limit


def _linear_kernel(x_ref, w_ref, b_ref, o_ref, acc_ref, *, apply_act: bool):
    k = pl.program_id(2)

    @pl.when(k == 0)
    def _():
        acc_ref[...] = jnp.zeros_like(acc_ref)

    # MXU matmul with fp32 accumulation (inputs may be bf16).
    acc_ref[...] += jnp.dot(
        x_ref[...], w_ref[...], preferred_element_type=jnp.float32
    )

    @pl.when(k == pl.num_programs(2) - 1)
    def _():
        y = acc_ref[...] + b_ref[...]
        if apply_act:
            y = jnp.tanh(y)
        o_ref[...] = y.astype(o_ref.dtype)


def pallas_linear(x, w, b, *, apply_act: bool):
    """y = act(x @ w + b), act = tanh or identity, tiled over (M, N, K)."""
    B, K = x.shape
    Kw, N = w.shape
    assert K == Kw and b.shape == (N,)

    compute_dtype = w.dtype               # stream activations in the weight dtype
    x = x.astype(compute_dtype)
    x_itemsize = jnp.dtype(compute_dtype).itemsize
    w_itemsize = jnp.dtype(w.dtype).itemsize

    # Pad to (8, 128) vreg-friendly shapes, then to tile multiples.
    Bp = _round_up(B, _SUBLANE)
    Kp = _round_up(K, _LANE)
    Np = _round_up(N, _LANE)
    tm, tk, tn, vmem_limit = _choose_tiles(Bp, Kp, Np, w_itemsize, x_itemsize)
    Bp = _round_up(Bp, tm)
    Kp = _round_up(Kp, tk)
    Np = _round_up(Np, tn)

    if (Bp, Kp) != (B, K):
        xp = jnp.zeros((Bp, Kp), compute_dtype).at[:B, :K].set(x)
    else:
        xp = x
    if (Kp, Np) != (K, N):
        wp = jnp.zeros((Kp, Np), w.dtype).at[:K, :N].set(w)
    else:
        wp = w
    bf = b.astype(jnp.float32)
    if Np != N:
        bp = jnp.zeros((1, Np), jnp.float32).at[0, :N].set(bf)
    else:
        bp = bf.reshape(1, N)

    n_i = Bp // tm
    n_j = Np // tn
    n_k = Kp // tk

    kernel = functools.partial(_linear_kernel, apply_act=apply_act)

    cost = pl.CostEstimate(
        flops=2 * Bp * Kp * Np,
        transcendentals=Bp * Np if apply_act else 0,
        bytes_accessed=(
            Bp * Kp * x_itemsize
            + Kp * Np * w_itemsize
            + Np * 4
            + Bp * Np * 4
        ),
    )

    out = pl.pallas_call(
        kernel,
        out_shape=jax.ShapeDtypeStruct((Bp, Np), jnp.float32),
        grid_spec=pltpu.PrefetchScalarGridSpec(
            num_scalar_prefetch=0,
            grid=(n_i, n_j, n_k),          # K reduction innermost
            in_specs=[
                pl.BlockSpec((tm, tk), lambda i, j, k: (i, k)),   # activations
                pl.BlockSpec((tk, tn), lambda i, j, k: (k, j)),   # weights (streamed)
                pl.BlockSpec((1, tn), lambda i, j, k: (0, j)),    # bias
            ],
            out_specs=pl.BlockSpec((tm, tn), lambda i, j, k: (i, j)),
            scratch_shapes=[pltpu.VMEM((tm, tn), jnp.float32)],
        ),
        compiler_params=pltpu.CompilerParams(
            dimension_semantics=("parallel", "parallel", "arbitrary"),
            vmem_limit_bytes=int(vmem_limit),
        ),
        cost_estimate=cost,
    )(xp, wp, bp)

    return out[:B, :N]


def init_mlp_params(key, sizes, weight_dtype=jnp.bfloat16):
    """Mimics nn.Linear's uniform(-1/sqrt(fan_in), 1/sqrt(fan_in)) init.

    Weights are stored [in, out] (transposed vs PyTorch) in bf16 to halve the
    HBM weight stream; biases stay fp32.
    """
    params = []
    for i in range(len(sizes) - 1):
        fan_in, fan_out = sizes[i], sizes[i + 1]
        key, kw, kb = jax.random.split(key, 3)
        bound = 1.0 / float(fan_in) ** 0.5
        w = jax.random.uniform(kw, (fan_in, fan_out), jnp.float32, -bound, bound)
        b = jax.random.uniform(kb, (fan_out,), jnp.float32, -bound, bound)
        params.append((w.astype(weight_dtype), b))
    return params


def mlp_forward(x, params):
    """Matches MLP.forward: Linear -> Tanh -> ... -> Linear (no act on last layer)."""
    n = len(params)
    for i, (w, b) in enumerate(params):
        x = pallas_linear(x, w, b, apply_act=(i < n - 1))
    return x


def mlp_reference(x, params):
    """Pure-JAX reference using the exact same (bf16) parameter values."""
    n = len(params)
    for i, (w, b) in enumerate(params):
        xc = x.astype(w.dtype).astype(jnp.float32)
        y = xc @ w.astype(jnp.float32) + b.astype(jnp.float32)
        if i < n - 1:
            y = jnp.tanh(y)
        x = y
    return x


if __name__ == "__main__":
    # Small demo sizes, lane-dense (multiples of 128) so output tiles use
    # unmasked stores.  Real ClipCap would be e.g. (512, 3840, 7680).
    sizes = (128, 256, 512)
    batch = 2

    key = jax.random.PRNGKey(0)
    key, kx = jax.random.split(key)
    x = jax.random.normal(kx, (batch, sizes[0]), dtype=jnp.float32)

    params = init_mlp_params(jax.random.PRNGKey(0), sizes)

    out = jax.block_until_ready(mlp_forward(x, params))
    ref = mlp_reference(x, params)

    assert out.shape == (batch, sizes[-1])
    assert jnp.allclose(out, ref, atol=2e-3, rtol=2e-3), "mismatch vs reference"

    print("KERNEL_OK")
</pallas_src>

<mosaic_0001>
module attributes {stable_mosaic.version = 11 : i64} {
  func.func @_linear_kernel(%arg0: i32, %arg1: i32, %arg2: i32, %arg3: memref<8x128xbf16, #tpu.memory_space<vmem>>, %arg4: memref<128x256xbf16, #tpu.memory_space<vmem>>, %arg5: memref<1x256xf32, #tpu.memory_space<vmem>>, %arg6: memref<8x256xf32, #tpu.memory_space<vmem>>, %arg7: memref<8x256xf32, #tpu.memory_space<vmem>>) attributes {dimension_semantics = [#tpu.dimension_semantics<parallel>, #tpu.dimension_semantics<parallel>, #tpu.dimension_semantics<arbitrary>], iteration_bounds = array<i64: 1, 1, 1>, scalar_prefetch = 0 : i64, scratch_operands = 1 : i64, tpu.core_type = #tpu.core_type<tc>, window_params = [{transform_indices = @transform_0, window_bounds = array<i64: 8, 128>}, {transform_indices = @transform_1, window_bounds = array<i64: 128, 256>}, {transform_indices = @transform_2, window_bounds = array<i64: 1, 256>}, {transform_indices = @transform_3, window_bounds = array<i64: 8, 256>}]} {
    %c0_i32 = arith.constant 0 : i32
    %0 = arith.cmpi eq, %arg2, %c0_i32 : i32
    %1 = arith.extui %0 : i1 to i32
    %c0_i32_0 = arith.constant 0 : i32
    %2 = arith.cmpi ne, %1, %c0_i32_0 : i32
    scf.if %2 {
      %cst_10 = arith.constant 0.000000e+00 : f32
      %12 = vector.broadcast %cst_10 : f32 to vector<8x256xf32>
      %c0_11 = arith.constant 0 : index
      %c0_12 = arith.constant 0 : index
      %13 = vector.load %arg7[%c0_11, %c0_12] : memref<8x256xf32, #tpu.memory_space<vmem>>, vector<8x256xf32>
      tpu.vector_store %arg7[%c0_11, %c0_12], %12 {strides = array<i32>} : memref<8x256xf32, #tpu.memory_space<vmem>>, vector<8x256xf32>,
    } else {
    }
    %c0 = arith.constant 0 : index
    %c0_1 = arith.constant 0 : index
    %3 = vector.load %arg7[%c0, %c0_1] : memref<8x256xf32, #tpu.memory_space<vmem>>, vector<8x256xf32>
    %c0_2 = arith.constant 0 : index
    %c0_3 = arith.constant 0 : index
    %4 = vector.load %arg3[%c0_2, %c0_3] : memref<8x128xbf16, #tpu.memory_space<vmem>>, vector<8x128xbf16>
    %c0_4 = arith.constant 0 : index
    %c0_5 = arith.constant 0 : index
    %5 = vector.load %arg4[%c0_4, %c0_5] : memref<128x256xbf16, #tpu.memory_space<vmem>>, vector<128x256xbf16>
    %cst = arith.constant dense<0.000000e+00> : vector<8x256xf32>
    %6 = tpu.matmul %4, %5, %cst {dimension_numbers = #tpu.dot_dimension_numbers<[1], [0], [0], [1], [0, 0, 1, 1], [], []>} : vector<8x128xbf16>, vector<128x256xbf16>, vector<8x256xf32> -> vector<8x256xf32>
    %7 = arith.addf %3, %6 : vector<8x256xf32>
    %c0_6 = arith.constant 0 : index
    %c0_7 = arith.constant 0 : index
    %8 = vector.load %arg7[%c0_6, %c0_7] : memref<8x256xf32, #tpu.memory_space<vmem>>, vector<8x256xf32>
    tpu.vector_store %arg7[%c0_6, %c0_7], %7 {strides = array<i32>} : memref<8x256xf32, #tpu.memory_space<vmem>>, vector<8x256xf32>,
    %c0_i32_8 = arith.constant 0 : i32
    %9 = arith.cmpi eq, %arg2, %c0_i32_8 : i32
    %10 = arith.extui %9 : i1 to i32
    %c0_i32_9 = arith.constant 0 : i32
    %11 = arith.cmpi ne, %10, %c0_i32_9 : i32
    scf.if %11 {
      %c0_10 = arith.constant 0 : index
      %c0_11 = arith.constant 0 : index
      %12 = vector.load %arg7[%c0_10, %c0_11] : memref<8x256xf32, #tpu.memory_space<vmem>>, vector<8x256xf32>
      %c0_12 = arith.constant 0 : index
      %c0_13 = arith.constant 0 : index
      %13 = vector.load %arg5[%c0_12, %c0_13] : memref<1x256xf32, #tpu.memory_space<vmem>>, vector<1x256xf32>
      %14 = vector.broadcast %13 : vector<1x256xf32> to vector<8x256xf32>
      %15 = arith.addf %12, %14 : vector<8x256xf32>
      %16 = math.tanh %15 : vector<8x256xf32>
      %c0_14 = arith.constant 0 : index
      %c0_15 = arith.constant 0 : index
      %17 = vector.load %arg6[%c0_14, %c0_15] : memref<8x256xf32, #tpu.memory_space<vmem>>, vector<8x256xf32>
      tpu.vector_store %arg6[%c0_14, %c0_15], %16 {strides = array<i32>} : memref<8x256xf32, #tpu.memory_space<vmem>>, vector<8x256xf32>,
    } else {
    }
    return
  }
  func.func @transform_0(%arg0: i32, %arg1: i32, %arg2: i32) -> (i32, i32) {
    %c0_i32 = arith.constant 0 : i32
    return %arg0, %arg2 : i32, i32
  }
  func.func @transform_1(%arg0: i32, %arg1: i32, %arg2: i32) -> (i32, i32) {
    %c0_i32 = arith.constant 0 : i32
    return %arg2, %arg1 : i32, i32
  }
  func.func @transform_2(%arg0: i32, %arg1: i32, %arg2: i32) -> (i32, i32) {
    %c0_i32 = arith.constant 0 : i32
    %c0_i32_0 = arith.constant 0 : i32
    return %c0_i32, %arg1 : i32, i32
  }
  func.func @transform_3(%arg0: i32, %arg1: i32, %arg2: i32) -> (i32, i32) {
    %c0_i32 = arith.constant 0 : i32
    return %arg0, %arg1 : i32, i32
  }
}

</mosaic_0001>

<llo_original>
// kernel: tpu_custom_call.1
$region0: #{tpu_custom_call.1}
  #allocation0 [shape = 'u32[]', space=smem, size = 0x4, offset = 0x4, fixed_abs, tag = 'smem constant byte address 0x4 - core index']
  #allocation1 [shape = 'u32[144,128]{1,0:T(1,128)}', space=vmem, size = 0x12000, scoped, tag = 'internal scratch']
  #allocation2 [shape = 'f32[8,256]{1,0:T(8,128)}', space=vmem, size = 0x2000, scoped, tag = 'scratch operand']
  %s0 = inlined_call_operand.hbm [shape: bf16[8,128], index: 0, kind: input, shape index: {}]
  %s1 = inlined_call_operand.hbm [shape: bf16[128,256], index: 1, kind: input, shape index: {}]
  %s2 = inlined_call_operand.vmem [shape: f32[1,256], index: 2, kind: input, shape index: {}]
  %s3 = inlined_call_operand.hbm [shape: f32[8,256], index: 3, kind: output, shape index: {}]
  %s4 = sld [smem:[#allocation0]]
  $region38: #{tpu_custom_call.1} parent=0
    _
  %s6 = ssub.s32 1, %s4
  %s7 = scalar_select 0, %s6, %s4
  $region1: #{tpu_custom_call.1} parent=0
    #allocation3 [shape = 'u8[2048]{0}', space=vmem, size = 0x800, scoped, tag = 'input window, operand 0, single buffered']
    #allocation4 [shape = 's32[1]{0}', space=sflag, size = 0x4, scoped, tag = 'scoped memory for tpu_custom_call.1']
    #allocation5 [shape = 's32[1]{0}', space=sflag, size = 0x4, scoped, tag = 'scoped memory for tpu_custom_call.1']
    #allocation6 [shape = 'u8[65536]{0}', space=vmem, size = 0x10000, scoped, tag = 'input window, operand 1, single buffered']
    #allocation7 [shape = 's32[1]{0}', space=sflag, size = 0x4, scoped, tag = 'scoped memory for tpu_custom_call.1']
    #allocation8 [shape = 'u8[8192]{0}', space=vmem, size = 0x2000, scoped, tag = 'output window, operand 0, single buffered']
    %8 = vsyncpa [#allocation4], 0
    %9 = vsyncpa [#allocation7], 0
    %10 = vsyncpa [#allocation5], 0
    // Predicated region
    $region2: #{tpu_custom_call.1} parent=1 // pred_check
      _
    $region3: #{tpu_custom_call.1} parent=1 // pred_check_branch
      %12 = sbr.rel (0) target = $region5
    $region4: #{tpu_custom_call.1} parent=1 // pred_region
      %s14 = ssub.s32 64, 64
      %15 = vsyncadd [#allocation4], %s14
      %s17 = sshll.u32 [#allocation3], 4
      %s18 = int_to_ptr.vmem [resolvable:$true] %s17
      %20 = dma.hbm_to_vmem [thread:$0]  %s0, 64, %s18, [#allocation4]
    $region5: #{tpu_custom_call.1} parent=1 // pred_fallthru
      _
    // Predicated region
    $region6: #{tpu_custom_call.1} parent=1 // pred_check
      _
    $region7: #{tpu_custom_call.1} parent=1 // pred_check_branch
      %22 = sbr.rel (0) target = $region9
    $region8: #{tpu_custom_call.1} parent=1 // pred_region
      %s24 = ssub.s32 2048, 2048
      %25 = vsyncadd [#allocation7], %s24
      %s26 = sshll.u32 [#allocation6], 4
      %s27 = int_to_ptr.vmem [resolvable:$true] %s26
      %32 = dma.hbm_to_vmem [thread:$0]  %s1, 2048, %s27, [#allocation7], 128, 128, 8
    $region9: #{tpu_custom_call.1} parent=1 // pred_fallthru
      _
    // Predicated region
    $region10: #{tpu_custom_call.1} parent=1 // pred_check
      _
    $region11: #{tpu_custom_call.1} parent=1 // pred_check_branch
      %34 = sbr.rel (0) target = $region13
    $region12: #{tpu_custom_call.1} parent=1 // pred_region
      _
    $region13: #{tpu_custom_call.1} parent=1 // pred_fallthru
      _
    // Predicated region
    $region14: #{tpu_custom_call.1} parent=1 // pred_check
      _
    $region15: #{tpu_custom_call.1} parent=1 // pred_check_branch
      %36 = sbr.rel (0) target = $region17
    $region16: #{tpu_custom_call.1} parent=1 // pred_region
      %37 = dma.done [#allocation4], 64
    $region17: #{tpu_custom_call.1} parent=1 // pred_fallthru
      _
    // Predicated region
    $region18: #{tpu_custom_call.1} parent=1 // pred_check
      _
    $region19: #{tpu_custom_call.1} parent=1 // pred_check_branch
      %39 = sbr.rel (0) target = $region21
    $region20: #{tpu_custom_call.1} parent=1 // pred_region
      %40 = dma.done [#allocation7], 2048
    $region21: #{tpu_custom_call.1} parent=1 // pred_fallthru
      _
    %p42 = scmp.eq.s32.totalorder 0, 0
    // Predicated region
    $region22: #{tpu_custom_call.1} parent=1 // pred_check
      %p43 = pneg %p42
    $region23: #{tpu_custom_call.1} parent=1 // pred_check_branch
      %45 = sbr.rel (%p43) target = $region25
    $region24: #{tpu_custom_call.1} parent=1 // pred_region
      %46 = vst [vmem:[#allocation2] sm:$0xff] 0.0
      %47 = vst [vmem:[#allocation2 + $0x8] sm:$0xff] 0.0
    $region25: #{tpu_custom_call.1} parent=1 // pred_fallthru
      _
    %v48 = vld [vmem:[#allocation2] sm:$0xff]
    %v49 = vld [vmem:[#allocation2 + $0x8] sm:$0xff]
    %v50 = vld [vmem:[#allocation3] sm:$0xf]
    %v51 = vld [vmem:[#allocation6] sm:$0xff]
    %v52 = vld [vmem:[#allocation6 + $0x8] sm:$0xff]
    %v53 = vld [vmem:[#allocation6 + $0x10] sm:$0xff]
    %v54 = vld [vmem:[#allocation6 + $0x18] sm:$0xff]
    %v55 = vld [vmem:[#allocation6 + $0x20] sm:$0xff]
    %v56 = vld [vmem:[#allocation6 + $0x28] sm:$0xff]
    %v57 = vld [vmem:[#allocation6 + $0x30] sm:$0xff]
    %v58 = vld [vmem:[#allocation6 + $0x38] sm:$0xff]
    %v59 = vld [vmem:[#allocation6 + $0x40] sm:$0xff]
    %v60 = vld [vmem:[#allocation6 + $0x48] sm:$0xff]
    %v61 = vld [vmem:[#allocation6 + $0x50] sm:$0xff]
    %v62 = vld [vmem:[#allocation6 + $0x58] sm:$0xff]
    %v63 = vld [vmem:[#allocation6 + $0x60] sm:$0xff]
    %v64 = vld [vmem:[#allocation6 + $0x68] sm:$0xff]
    %v65 = vld [vmem:[#allocation6 + $0x70] sm:$0xff]
    %v66 = vld [vmem:[#allocation6 + $0x78] sm:$0xff]
    %v83 = vunpack.c.l.b16 %v51
    %v84 = vunpack.c.h.b16 %v51
    %v85 = vunpack.c.l.b16 %v52
    %v86 = vunpack.c.h.b16 %v52
    %v87 = vunpack.c.l.b16 %v53
    %v88 = vunpack.c.h.b16 %v53
    %v89 = vunpack.c.l.b16 %v54
    %v90 = vunpack.c.h.b16 %v54
    %v91 = vunpack.c.l.b16 %v55
    %v92 = vunpack.c.h.b16 %v55
    %v93 = vunpack.c.l.b16 %v56
    %v94 = vunpack.c.h.b16 %v56
    %v95 = vunpack.c.l.b16 %v57
    %v96 = vunpack.c.h.b16 %v57
    %v97 = vunpack.c.l.b16 %v58
    %v98 = vunpack.c.h.b16 %v58
    %v99 = vunpack.c.l.b16 %v59
    %v100 = vunpack.c.h.b16 %v59
    %v101 = vunpack.c.l.b16 %v60
    %v102 = vunpack.c.h.b16 %v60
    %v103 = vunpack.c.l.b16 %v61
    %v104 = vunpack.c.h.b16 %v61
    %v105 = vunpack.c.l.b16 %v62
    %v106 = vunpack.c.h.b16 %v62
    %v107 = vunpack.c.l.b16 %v63
    %v108 = vunpack.c.h.b16 %v63
    %v109 = vunpack.c.l.b16 %v64
    %v110 = vunpack.c.h.b16 %v64
    %v111 = vunpack.c.l.b16 %v65
    %v112 = vunpack.c.h.b16 %v65
    %v113 = vunpack.c.l.b16 %v66
    %v114 = vunpack.c.h.b16 %v66
    %v115 = vpack.c.b16 %v85, %v83
    %v116 = vpack.c.b16 %v86, %v84
    %v117 = vpack.c.b16 %v89, %v87
    %v118 = vpack.c.b16 %v90, %v88
    %v119 = vpack.c.b16 %v93, %v91
    %v120 = vpack.c.b16 %v94, %v92
    %v121 = vpack.c.b16 %v97, %v95
    %v122 = vpack.c.b16 %v98, %v96
    %v123 = vpack.c.b16 %v101, %v99
    %v124 = vpack.c.b16 %v102, %v100
    %v125 = vpack.c.b16 %v105, %v103
    %v126 = vpack.c.b16 %v106, %v104
    %v127 = vpack.c.b16 %v109, %v107
    %v128 = vpack.c.b16 %v110, %v108
    %v129 = vpack.c.b16 %v113, %v111
    %v130 = vpack.c.b16 %v114, %v112
    %147 = vmatprep.subr.bf16.mxu0 %v130
    %148 = vmatpush1.bf16.msra.mxu0 %v129
    %149 = vmatprep.subr.bf16.mxu0 %v128
    %150 = vmatpush1.bf16.msra.mxu0 %v127
    %151 = vmatprep.subr.bf16.mxu0 %v126
    %152 = vmatpush1.bf16.msra.mxu0 %v125
    %153 = vmatprep.subr.bf16.mxu0 %v124
    %154 = vmatpush1.bf16.msra.mxu0 %v123
    %155 = vmatprep.subr.bf16.mxu0 %v122
    %156 = vmatpush1.bf16.msra.mxu0 %v121
    %157 = vmatprep.subr.bf16.mxu0 %v120
    %158 = vmatpush1.bf16.msra.mxu0 %v119
    %159 = vmatprep.subr.bf16.mxu0 %v118
    %160 = vmatpush1.bf16.msra.mxu0 %v117
    %161 = vmatprep.subr.bf16.mxu0 %v116
    %162 = vmatpush1.bf16.msra.mxu0 %v115
    %163 = vmatprep.subr.bf16.mxu0 0
    %164 = vmatpush2.bf16.msra.mxu0 0
    %165 = vmatprep.subr.bf16.mxu0 0
    %166 = vmatpush2.bf16.msra.mxu0 0
    %167 = vmatprep.subr.bf16.mxu0 0
    %168 = vmatpush2.bf16.msra.mxu0 0
    %169 = vmatprep.subr.bf16.mxu0 0
    %170 = vmatpush2.bf16.msra.mxu0 0
    %171 = vmatprep.subr.bf16.mxu0 0
    %172 = vmatpush2.bf16.msra.mxu0 0
    %173 = vmatprep.subr.bf16.mxu0 0
    %174 = vmatpush2.bf16.msra.mxu0 0
    %175 = vmatprep.subr.bf16.mxu0 0
    %176 = vmatpush2.bf16.msra.mxu0 0
    %177 = vmatprep.subr.bf16.mxu0 0
    %178 = vmatpush2.bf16.msra.mxu0 0
    %179 = vmatprep.mubr.bf16.mxu0 0
    %180 = vmatmul.mubr.bf16.gmra.mxu0 %v50
    %v181 = vpop.f32.mrf.mxu0
    %v182 = vadd.f32 0.0, %v181
    %v183 = vpop.f32.mrf.mxu0
    %v184 = vadd.f32 0.0, %v183
    %v185 = vpop.f32.mrf.mxu0
    %v186 = vpop.f32.mrf.mxu0
    %187 = vdwg.mxu0
    %v188 = vadd.f32 %v48, %v182
    %v189 = vadd.f32 %v49, %v184
    %190 = vst [vmem:[#allocation2] sm:$0xff] %v188
    %191 = vst [vmem:[#allocation2 + $0x8] sm:$0xff] %v189
    // Predicated region
    $region26: #{tpu_custom_call.1} parent=1 // pred_check
      %p192 = pneg %p42
    $region27: #{tpu_custom_call.1} parent=1 // pred_check_branch
      %194 = sbr.rel (%p192) target = $region29
    $region28: #{tpu_custom_call.1} parent=1 // pred_region
      %v195 = vld [vmem:[#allocation2] sm:$0xff]
      %v196 = vld [vmem:[#allocation2 + $0x8] sm:$0xff]
      %v197 = vld [vmem:[%s2] sm:$0x3]
      %v199 = vlaneseq
      %v200 = vshrl.u32 %v199, 7
      %v201 = vsub.s32 0, %v200
      %v202 = vrot.slane %v197, %v201
      %v203 = vlaneseq
      %v204 = vshrl.u32 %v203, 7
      %v205 = vsub.s32 1, %v204
      %v206 = vrot.slane %v197, %v205
      %v209 = vadd.f32 %v195, %v202
      %v210 = vadd.f32 %v196, %v206
      %v211 = vtanh.pop %v209
      %v212 = vtanh.pop %v210
      %213 = vst [vmem:[#allocation8] sm:$0xff] %v211
      %214 = vst [vmem:[#allocation8 + $0x8] sm:$0xff] %v212
    $region29: #{tpu_custom_call.1} parent=1 // pred_fallthru
      _
    // Predicated region
    $region30: #{tpu_custom_call.1} parent=1 // pred_check
      _
    $region31: #{tpu_custom_call.1} parent=1 // pred_check_branch
      %216 = sbr.rel (0) target = $region33
    $region32: #{tpu_custom_call.1} parent=1 // pred_region
      %s218 = ssub.s32 256, 256
      %219 = vsyncadd [#allocation5], %s218
      %s221 = sshll.u32 [#allocation8], 4
      %s222 = int_to_ptr.vmem [resolvable:$true] %s221
      %224 = dma.vmem_to_hbm [thread:$0]  %s222, 256, %s3, [#allocation5]
    $region33: #{tpu_custom_call.1} parent=1 // pred_fallthru
      _
    // Predicated region
    $region34: #{tpu_custom_call.1} parent=1 // pred_check
      _
    $region35: #{tpu_custom_call.1} parent=1 // pred_check_branch
      %226 = sbr.rel (0) target = $region37
    $region36: #{tpu_custom_call.1} parent=1 // pred_region
      %227 = dma.done [#allocation5], 256
    $region37: #{tpu_custom_call.1} parent=1 // pred_fallthru
      _
    %228 = vsyncpa [#allocation4], 1
    %229 = vsyncpa [#allocation7], 1
    %230 = vsyncpa [#allocation5], 1

</llo_original>
